<compile_context>
chip_gen: v5e
topology: v5e:2x2
jax: 0.10.0
libtpu: 0.0.40
codegen_flags: <defaults>
</compile_context>

<pallas_src>
import functools

import jax
import jax.numpy as jnp
from jax.experimental import pallas as pl
from jax.experimental.pallas import tpu as pltpu


def _patch_merging_kernel(top_ref, bot_ref, g_ref, b_ref, w_ref, o_ref, *, eps):
    # top_ref/bot_ref: (th, W2, 2C) — dh=0 / dh=1 slabs, channels = [dw=0 | dw=1]
    # g_ref/b_ref:     (2, 2C) f32  — row 0: params for top slab, row 1: bottom
    # w_ref:           (2, 2C, N)   — row blocks of the reduction weight, permuted
    # o_ref:           (th, W2, N)
    th, w2, c2 = top_ref.shape
    n = o_ref.shape[-1]
    rows = th * w2
    c4 = 2.0 * c2

    top = top_ref[...].reshape(rows, c2)
    bot = bot_ref[...].reshape(rows, c2)
    tf = top.astype(jnp.float32)
    bf = bot.astype(jnp.float32)

    # LayerNorm over the full 4C features (top ∪ bot), biased variance like torch.
    mean = (jnp.sum(tf, axis=-1, keepdims=True)
            + jnp.sum(bf, axis=-1, keepdims=True)) / c4
    ct = tf - mean
    cb = bf - mean
    var = (jnp.sum(ct * ct, axis=-1, keepdims=True)
           + jnp.sum(cb * cb, axis=-1, keepdims=True)) / c4
    inv = jax.lax.rsqrt(var + eps)

    yt = (ct * inv) * g_ref[0:1, :] + b_ref[0:1, :]
    yb = (cb * inv) * g_ref[1:2, :] + b_ref[1:2, :]

    # Reduction: 4C -> N as two 2C -> N MXU matmuls, f32 accumulation.
    mm_dtype = w_ref.dtype
    acc = jnp.dot(yt.astype(mm_dtype), w_ref[0],
                  preferred_element_type=jnp.float32)
    acc = acc + jnp.dot(yb.astype(mm_dtype), w_ref[1],
                        preferred_element_type=jnp.float32)

    o_ref[...] = acc.reshape(th, w2, n).astype(o_ref.dtype)


def _largest_divisor_leq(n, cap):
    cap = max(1, min(cap, n))
    for d in range(cap, 0, -1):
        if n % d == 0:
            return d
    return 1


def _choose_row_tile(bh2, w2, target_rows):
    th = _largest_divisor_leq(bh2, max(1, target_rows // max(w2, 1)))
    # Prefer >=2 grid steps so a v7x chip can shard the grid over its 2 TCs.
    if bh2 // th < 2 and bh2 > 1:
        th = _largest_divisor_leq(bh2, max(1, th // 2))
    return th


def patch_merging(x, gamma, beta, weight, input_resolution, *, eps=1e-5, tm=512):
    """x: (B, L, C); gamma/beta: (4C,); weight: (4C, 2C) (in, out).
    Returns (B, L//4, 2C), matching the PyTorch PatchMerging forward."""
    H, W = input_resolution
    B, L, C = x.shape
    assert L == H * W, "input feature has wrong size"
    assert H % 2 == 0 and W % 2 == 0, f"x size ({H}*{W}) are not even."

    H2, W2 = H // 2, W // 2
    BH2 = B * H2
    C2, C4 = 2 * C, 4 * C
    N = 2 * C
    M_rows = BH2 * W2

    # --- free reshape (contiguous): (B, H*W, C) -> (B*H2, 2, W2, 2C) ---
    # index (bh2, dh, w2, dw*C + c)  <->  x[b, 2*h2+dh, 2*w2+dw, c]
    xr = x.reshape(BH2, 2, W2, C2)

    # --- pre-permute LN params / weight rows from torch's [x0|x1|x2|x3] column
    # order ([(0,0),(1,0),(0,1),(1,1)]) to the slab order:
    #   top slab (dh=0): [x0 | x2],  bottom slab (dh=1): [x1 | x3]
    def _split_ln(p):
        p4 = p.reshape(4, C)
        return jnp.stack([jnp.concatenate([p4[0], p4[2]]),
                          jnp.concatenate([p4[1], p4[3]])])      # (2, 2C)

    g_pack = _split_ln(gamma.astype(jnp.float32))
    b_pack = _split_ln(beta.astype(jnp.float32))

    w4 = weight.reshape(4, C, N).astype(x.dtype)                  # MXU-native dtype
    w_pack = jnp.stack([jnp.concatenate([w4[0], w4[2]], axis=0),
                        jnp.concatenate([w4[1], w4[3]], axis=0)])  # (2, 2C, N)

    # --- row-tile selection: target ~tm merged rows/step, fit VMEM budget ---
    itemsize = jnp.dtype(x.dtype).itemsize
    th = _choose_row_tile(BH2, W2, tm)

    def _vmem_est(t):
        rows = t * W2
        return (2 * 2 * rows * C2 * itemsize      # top + bot input blocks, x2 buffers
                + 2 * rows * N * itemsize         # output block, x2 buffers
                + 2 * 2 * C2 * N * itemsize       # resident weight, x2 buffers
                + 2 * 2 * 2 * C2 * 4)             # gamma/beta (f32)

    budget = 12 * 1024 * 1024                     # headroom under v5e's 16 MiB default
    while th > 1 and _vmem_est(th) > budget:
        th = _largest_divisor_leq(BH2, th - 1)
    grid = (BH2 // th,)
    vmem_limit = int(min(max(2 * _vmem_est(th), 32 * 1024 * 1024),
                         60 * 1024 * 1024))

    cost = pl.CostEstimate(
        flops=2 * M_rows * C4 * N,
        transcendentals=M_rows,
        bytes_accessed=int(M_rows * C4 * itemsize + C4 * N * itemsize
                           + M_rows * N * itemsize + 4 * C4 * 4),
    )

    out = pl.pallas_call(
        functools.partial(_patch_merging_kernel, eps=eps),
        out_shape=jax.ShapeDtypeStruct((BH2, W2, N), x.dtype),
        grid_spec=pltpu.PrefetchScalarGridSpec(
            num_scalar_prefetch=0,
            grid=grid,
            in_specs=[
                # same xr passed twice: dh=0 slab and dh=1 slab
                pl.BlockSpec((th, None, W2, C2), lambda i: (i, 0, 0, 0)),
                pl.BlockSpec((th, None, W2, C2), lambda i: (i, 1, 0, 0)),
                pl.BlockSpec((2, C2), lambda i: (0, 0)),          # gamma (f32)
                pl.BlockSpec((2, C2), lambda i: (0, 0)),          # beta  (f32)
                pl.BlockSpec((2, C2, N), lambda i: (0, 0, 0)),    # weight
            ],
            out_specs=pl.BlockSpec((th, W2, N), lambda i: (i, 0, 0)),
        ),
        compiler_params=pltpu.CompilerParams(
            dimension_semantics=("parallel",),
            vmem_limit_bytes=vmem_limit,
        ),
        cost_estimate=cost,
    )(xr, xr, g_pack, b_pack, w_pack)

    return out.reshape(B, H2 * W2, N)


def _reference(x, gamma, beta, weight, input_resolution, eps=1e-5):
    H, W = input_resolution
    B, L, C = x.shape
    x4 = x.reshape(B, H, W, C)
    x0 = x4[:, 0::2, 0::2, :]
    x1 = x4[:, 1::2, 0::2, :]
    x2 = x4[:, 0::2, 1::2, :]
    x3 = x4[:, 1::2, 1::2, :]
    xm = jnp.concatenate([x0, x1, x2, x3], -1).reshape(B, -1, 4 * C)
    mean = jnp.mean(xm, -1, keepdims=True)
    var = jnp.mean((xm - mean) ** 2, -1, keepdims=True)
    xn = (xm - mean) / jnp.sqrt(var + eps) * gamma + beta
    return xn @ weight


if __name__ == "__main__":
    key = jax.random.PRNGKey(0)
    B, H, W, C = 2, 16, 16, 32              # dim=C, input_resolution=(H, W)
    L = H * W

    kx, kg, kb, kw = jax.random.split(key, 4)
    x = jax.random.normal(kx, (B, L, C), dtype=jnp.float32)
    # LayerNorm(4*dim) params (perturbed so the affine path is exercised).
    gamma = 1.0 + 0.1 * jax.random.normal(kg, (4 * C,), dtype=jnp.float32)
    beta = 0.1 * jax.random.normal(kb, (4 * C,), dtype=jnp.float32)
    # reduction: Linear(4*dim, 2*dim, bias=False); stored here as (in, out).
    weight = jax.random.normal(kw, (4 * C, 2 * C), dtype=jnp.float32) * 0.05

    out = patch_merging(x, gamma, beta, weight, (H, W))
    out = jax.block_until_ready(out)

    ref = _reference(x, gamma, beta, weight, (H, W))
    assert out.shape == (B, L // 4, 2 * C), out.shape
    assert jnp.allclose(out, ref, atol=1e-4, rtol=1e-4), float(
        jnp.max(jnp.abs(out - ref))
    )
    print("KERNEL_OK")
</pallas_src>

<mosaic_0001>
module attributes {stable_mosaic.version = 11 : i64} {
  func.func @_patch_merging_kernel(%arg0: i32, %arg1: memref<8x1x8x64xf32, #tpu.memory_space<vmem>>, %arg2: memref<8x1x8x64xf32, #tpu.memory_space<vmem>>, %arg3: memref<2x64xf32, #tpu.memory_space<vmem>>, %arg4: memref<2x64xf32, #tpu.memory_space<vmem>>, %arg5: memref<2x64x64xf32, #tpu.memory_space<vmem>>, %arg6: memref<8x8x64xf32, #tpu.memory_space<vmem>>) attributes {dimension_semantics = [#tpu.dimension_semantics<parallel>], iteration_bounds = array<i64: 2>, scalar_prefetch = 0 : i64, scratch_operands = 0 : i64, tpu.core_type = #tpu.core_type<tc>, window_params = [{transform_indices = @transform_0, window_bounds = array<i64: 8, 1, 8, 64>}, {transform_indices = @transform_1, window_bounds = array<i64: 8, 1, 8, 64>}, {pipeline_mode = #tpu.pipeline_mode<synchronous>, transform_indices = @transform_2, window_bounds = array<i64: 2, 64>}, {pipeline_mode = #tpu.pipeline_mode<synchronous>, transform_indices = @transform_3, window_bounds = array<i64: 2, 64>}, {pipeline_mode = #tpu.pipeline_mode<synchronous>, transform_indices = @transform_4, window_bounds = array<i64: 2, 64, 64>}, {transform_indices = @transform_5, window_bounds = array<i64: 8, 8, 64>}]} {
    %c0 = arith.constant 0 : index
    %c0_0 = arith.constant 0 : index
    %c0_1 = arith.constant 0 : index
    %c0_2 = arith.constant 0 : index
    %0 = vector.load %arg1[%c0, %c0_0, %c0_1, %c0_2] : memref<8x1x8x64xf32, #tpu.memory_space<vmem>>, vector<8x1x8x64xf32>
    %1 = vector.shape_cast %0 : vector<8x1x8x64xf32> to vector<8x8x64xf32>
    %2 = vector.shape_cast %1 : vector<8x8x64xf32> to vector<64x64xf32>
    %c0_3 = arith.constant 0 : index
    %c0_4 = arith.constant 0 : index
    %c0_5 = arith.constant 0 : index
    %c0_6 = arith.constant 0 : index
    %3 = vector.load %arg2[%c0_3, %c0_4, %c0_5, %c0_6] : memref<8x1x8x64xf32, #tpu.memory_space<vmem>>, vector<8x1x8x64xf32>
    %4 = vector.shape_cast %3 : vector<8x1x8x64xf32> to vector<8x8x64xf32>
    %5 = vector.shape_cast %4 : vector<8x8x64xf32> to vector<64x64xf32>
    %cst = arith.constant dense<0.000000e+00> : vector<64xf32>
    %6 = vector.multi_reduction <add>, %2, %cst [1] : vector<64x64xf32> to vector<64xf32>
    %7 = vector.shape_cast %6 : vector<64xf32> to vector<64x1xf32>
    %cst_7 = arith.constant dense<0.000000e+00> : vector<64xf32>
    %8 = vector.multi_reduction <add>, %5, %cst_7 [1] : vector<64x64xf32> to vector<64xf32>
    %9 = vector.shape_cast %8 : vector<64xf32> to vector<64x1xf32>
    %10 = arith.addf %7, %9 : vector<64x1xf32>
    %cst_8 = arith.constant 1.280000e+02 : f32
    %11 = vector.broadcast %cst_8 : f32 to vector<64x1xf32>
    %12 = arith.divf %10, %11 : vector<64x1xf32>
    %13 = vector.broadcast %12 : vector<64x1xf32> to vector<64x64xf32>
    %14 = arith.subf %2, %13 : vector<64x64xf32>
    %15 = vector.broadcast %12 : vector<64x1xf32> to vector<64x64xf32>
    %16 = arith.subf %5, %15 : vector<64x64xf32>
    %17 = arith.mulf %14, %14 : vector<64x64xf32>
    %cst_9 = arith.constant dense<0.000000e+00> : vector<64xf32>
    %18 = vector.multi_reduction <add>, %17, %cst_9 [1] : vector<64x64xf32> to vector<64xf32>
    %19 = vector.shape_cast %18 : vector<64xf32> to vector<64x1xf32>
    %20 = arith.mulf %16, %16 : vector<64x64xf32>
    %cst_10 = arith.constant dense<0.000000e+00> : vector<64xf32>
    %21 = vector.multi_reduction <add>, %20, %cst_10 [1] : vector<64x64xf32> to vector<64xf32>
    %22 = vector.shape_cast %21 : vector<64xf32> to vector<64x1xf32>
    %23 = arith.addf %19, %22 : vector<64x1xf32>
    %cst_11 = arith.constant 1.280000e+02 : f32
    %24 = vector.broadcast %cst_11 : f32 to vector<64x1xf32>
    %25 = arith.divf %23, %24 : vector<64x1xf32>
    %cst_12 = arith.constant 9.99999974E-6 : f32
    %26 = vector.broadcast %cst_12 : f32 to vector<64x1xf32>
    %27 = arith.addf %25, %26 : vector<64x1xf32>
    %28 = math.rsqrt %27 : vector<64x1xf32>
    %29 = vector.broadcast %28 : vector<64x1xf32> to vector<64x64xf32>
    %30 = arith.mulf %14, %29 : vector<64x64xf32>
    %c0_13 = arith.constant 0 : index
    %c0_14 = arith.constant 0 : index
    %31 = vector.load %arg3[%c0_13, %c0_14] : memref<2x64xf32, #tpu.memory_space<vmem>>, vector<1x64xf32>
    %32 = vector.broadcast %31 : vector<1x64xf32> to vector<64x64xf32>
    %33 = arith.mulf %30, %32 : vector<64x64xf32>
    %c0_15 = arith.constant 0 : index
    %c0_16 = arith.constant 0 : index
    %34 = vector.load %arg4[%c0_15, %c0_16] : memref<2x64xf32, #tpu.memory_space<vmem>>, vector<1x64xf32>
    %35 = vector.broadcast %34 : vector<1x64xf32> to vector<64x64xf32>
    %36 = arith.addf %33, %35 : vector<64x64xf32>
    %37 = vector.broadcast %28 : vector<64x1xf32> to vector<64x64xf32>
    %38 = arith.mulf %16, %37 : vector<64x64xf32>
    %c1 = arith.constant 1 : index
    %c0_17 = arith.constant 0 : index
    %39 = vector.load %arg3[%c1, %c0_17] : memref<2x64xf32, #tpu.memory_space<vmem>>, vector<1x64xf32>
    %40 = vector.broadcast %39 : vector<1x64xf32> to vector<64x64xf32>
    %41 = arith.mulf %38, %40 : vector<64x64xf32>
    %c1_18 = arith.constant 1 : index
    %c0_19 = arith.constant 0 : index
    %42 = vector.load %arg4[%c1_18, %c0_19] : memref<2x64xf32, #tpu.memory_space<vmem>>, vector<1x64xf32>
    %43 = vector.broadcast %42 : vector<1x64xf32> to vector<64x64xf32>
    %44 = arith.addf %41, %43 : vector<64x64xf32>
    %c0_20 = arith.constant 0 : index
    %c0_21 = arith.constant 0 : index
    %c0_22 = arith.constant 0 : index
    %45 = vector.load %arg5[%c0_20, %c0_21, %c0_22] : memref<2x64x64xf32, #tpu.memory_space<vmem>>, vector<1x64x64xf32>
    %46 = vector.shape_cast %45 : vector<1x64x64xf32> to vector<64x64xf32>
    %cst_23 = arith.constant dense<0.000000e+00> : vector<64x64xf32>
    %47 = tpu.matmul %36, %46, %cst_23 {dimension_numbers = #tpu.dot_dimension_numbers<[1], [0], [0], [1], [0, 0, 1, 1], [], []>} : vector<64x64xf32>, vector<64x64xf32>, vector<64x64xf32> -> vector<64x64xf32>
    %c1_24 = arith.constant 1 : index
    %c0_25 = arith.constant 0 : index
    %c0_26 = arith.constant 0 : index
    %48 = vector.load %arg5[%c1_24, %c0_25, %c0_26] : memref<2x64x64xf32, #tpu.memory_space<vmem>>, vector<1x64x64xf32>
    %49 = vector.shape_cast %48 : vector<1x64x64xf32> to vector<64x64xf32>
    %cst_27 = arith.constant dense<0.000000e+00> : vector<64x64xf32>
    %50 = tpu.matmul %44, %49, %cst_27 {dimension_numbers = #tpu.dot_dimension_numbers<[1], [0], [0], [1], [0, 0, 1, 1], [], []>} : vector<64x64xf32>, vector<64x64xf32>, vector<64x64xf32> -> vector<64x64xf32>
    %51 = arith.addf %47, %50 : vector<64x64xf32>
    %52 = vector.shape_cast %51 : vector<64x64xf32> to vector<8x8x64xf32>
    %c0_28 = arith.constant 0 : index
    %c0_29 = arith.constant 0 : index
    %c0_30 = arith.constant 0 : index
    %53 = vector.load %arg6[%c0_28, %c0_29, %c0_30] : memref<8x8x64xf32, #tpu.memory_space<vmem>>, vector<8x8x64xf32>
    tpu.vector_store %arg6[%c0_28, %c0_29, %c0_30], %52 {strides = array<i32>} : memref<8x8x64xf32, #tpu.memory_space<vmem>>, vector<8x8x64xf32>,
    return
  }
  func.func @transform_0(%arg0: i32) -> (i32, i32, i32, i32) {
    %c0_i32 = arith.constant 0 : i32
    %c0_i32_0 = arith.constant 0 : i32
    %c0_i32_1 = arith.constant 0 : i32
    %c0_i32_2 = arith.constant 0 : i32
    return %arg0, %c0_i32, %c0_i32_0, %c0_i32_1 : i32, i32, i32, i32
  }
  func.func @transform_1(%arg0: i32) -> (i32, i32, i32, i32) {
    %c1_i32 = arith.constant 1 : i32
    %c0_i32 = arith.constant 0 : i32
    %c0_i32_0 = arith.constant 0 : i32
    %c0_i32_1 = arith.constant 0 : i32
    return %arg0, %c1_i32, %c0_i32, %c0_i32_0 : i32, i32, i32, i32
  }
  func.func @transform_2(%arg0: i32) -> (i32, i32) {
    %c0_i32 = arith.constant 0 : i32
    %c0_i32_0 = arith.constant 0 : i32
    %c0_i32_1 = arith.constant 0 : i32
    return %c0_i32, %c0_i32_0 : i32, i32
  }
  func.func @transform_3(%arg0: i32) -> (i32, i32) {
    %c0_i32 = arith.constant 0 : i32
    %c0_i32_0 = arith.constant 0 : i32
    %c0_i32_1 = arith.constant 0 : i32
    return %c0_i32, %c0_i32_0 : i32, i32
  }
  func.func @transform_4(%arg0: i32) -> (i32, i32, i32) {
    %c0_i32 = arith.constant 0 : i32
    %c0_i32_0 = arith.constant 0 : i32
    %c0_i32_1 = arith.constant 0 : i32
    %c0_i32_2 = arith.constant 0 : i32
    return %c0_i32, %c0_i32_0, %c0_i32_1 : i32, i32, i32
  }
  func.func @transform_5(%arg0: i32) -> (i32, i32, i32) {
    %c0_i32 = arith.constant 0 : i32
    %c0_i32_0 = arith.constant 0 : i32
    %c0_i32_1 = arith.constant 0 : i32
    return %arg0, %c0_i32, %c0_i32_0 : i32, i32, i32
  }
}

</mosaic_0001>

<llo_original>
// kernel: tpu_custom_call.1
$region0: #{tpu_custom_call.1}
  #allocation0 [shape = 'u32[]', space=smem, size = 0x4, offset = 0x4, fixed_abs, tag = 'smem constant byte address 0x4 - core index']
  #allocation1 [shape = 'u32[72,128]{1,0:T(1,128)}', space=vmem, size = 0x9000, scoped, tag = 'internal scratch']
  %s0 = inlined_call_operand.hbm [shape: f32[16,2,8,64], index: 0, kind: input, shape index: {}]
  %s1 = inlined_call_operand.hbm [shape: f32[16,2,8,64], index: 1, kind: input, shape index: {}]
  %s2 = inlined_call_operand.hbm [shape: f32[2,64], index: 2, kind: input, shape index: {}]
  %s3 = inlined_call_operand.vmem [shape: f32[2,64], index: 3, kind: input, shape index: {}]
  %s4 = inlined_call_operand.hbm [shape: f32[2,64,64], index: 4, kind: input, shape index: {}]
  %s5 = inlined_call_operand.hbm [shape: f32[16,8,64], index: 5, kind: output, shape index: {}]
  %s6 = sld [smem:[#allocation0]]
  $region69: #{tpu_custom_call.1} parent=0
    _
  %s8 = ssub.s32 1, %s6
  %s9 = scalar_select 0, %s8, %s6
  $region1: #{tpu_custom_call.1} parent=0
    #allocation2 [shape = 'u8[65536]{0}', space=vmem, size = 0x10000, scoped, tag = 'input window, operand 0']
    #allocation3 [shape = 's32[2]{0}', space=sflag, size = 0x8, scoped, tag = 'scoped memory for tpu_custom_call.1']
    #allocation4 [shape = 's32[2]{0}', space=sflag, size = 0x8, scoped, tag = 'scoped memory for tpu_custom_call.1']
    #allocation5 [shape = 'u8[65536]{0}', space=vmem, size = 0x10000, scoped, tag = 'input window, operand 1']
    #allocation6 [shape = 's32[2]{0}', space=sflag, size = 0x8, scoped, tag = 'scoped memory for tpu_custom_call.1']
    #allocation7 [shape = 'u8[1024]{0}', space=vmem, size = 0x400, scoped, tag = 'input window, operand 2, single buffered']
    #allocation8 [shape = 'u8[65536]{0}', space=vmem, size = 0x10000, scoped, tag = 'input window, operand 4, single buffered']
    #allocation9 [shape = 's32[1]{0}', space=sflag, size = 0x4, scoped, tag = 'scoped memory for tpu_custom_call.1']
    #allocation10 [shape = 'u8[65536]{0}', space=vmem, size = 0x10000, scoped, tag = 'output window, operand 0']
    %10 = vsyncpa [#allocation3], 0
    %s11 = scalar_lea.sflag [#allocation3], 1
    %12 = vsyncpa %s11, 0
    %13 = vsyncpa [#allocation6], 0
    %s14 = scalar_lea.sflag [#allocation6], 1
    %15 = vsyncpa %s14, 0
    %16 = vsyncpa [#allocation9], 0
    %17 = vsyncpa [#allocation4], 0
    %s18 = scalar_lea.sflag [#allocation4], 1
    %19 = vsyncpa %s18, 0
    loop: start=0, step=1, limit=4
    $region2: #{tpu_custom_call.1} parent=1 // loop_pre_header
      _
    $region3: #{tpu_custom_call.1} parent=1 // loop_header
      %s21 = sphi 0, %s25
      %p22 = scmp.ge.s32.totalorder %s21, 4
      %s31 = sphi 0, %s33
      %s34 = sphi 0, %s31
      %s35 = sphi 0, %s34
      %s51 = sphi 0, %s35
      %s57 = sphi 0, %s59
      %s60 = sphi 0, %s57
      %s61 = sphi 0, %s60
      %s77 = sphi 0, %s61
      %s81 = sphi 0, %s81
      %s83 = sphi 0, %s81
      %s84 = sphi 0, %s83
      %s98 = sphi 0, %s84
      %s102 = sphi 0, %s102
      %s104 = sphi 0, %s102
      %s105 = sphi 0, %s104
      %s119 = sphi 0, %s105
      %s123 = sphi 0, %s123
      %s125 = sphi 0, %s123
      %s126 = sphi 0, %s125
      %s140 = sphi 0, %s126
      %s146 = sphi 0, %s148
      %s149 = sphi 0, %s146
      %s150 = sphi 0, %s149
      %s166 = sphi 0, %s150
    $region4: #{tpu_custom_call.1} parent=1 // loop_header_branch
      %24 = sbr.rel (%p22) target = $region8
    $region5: #{tpu_custom_call.1} parent=1 // loop_body
      %s26 = ssub.s32 %s21, 1
      %s27 = ssub.s32 %s21, 2
      %s28 = sadd.s32 %s21, 1
      %s29 = ssub.s32 %s21, %s28
      %p30 = scmp.eq.s32.totalorder %s29, 0
      %s32 = sadd.s32 %s31, 1
      %s33 = scalar_select %p30, %s31, %s32
      %p36 = pneg %p30
      %p37 = scmp.eq.s32.totalorder %s21, 1
      %p38 = por %p36, %p37
      %p39 = scmp.ne.s32.totalorder %s31, %s34
      %p40 = scmp.eq.s32.totalorder %s21, 0
      %p41 = por %p39, %p40
      %p42 = scmp.ne.s32.totalorder %s31, %s34
      %p43 = scmp.eq.s32.totalorder %s26, 1
      %p44 = por %p42, %p43
      %p45 = scmp.ne.s32.totalorder %s34, %s35
      %p46 = scmp.eq.s32.totalorder %s26, 0
      %p47 = por %p45, %p46
      %p48 = scmp.ne.s32.totalorder %s34, %s35
      %p49 = scmp.eq.s32.totalorder %s27, 1
      %p50 = por %p48, %p49
      %p52 = scmp.ne.s32.totalorder %s35, %s51
      %p53 = scmp.eq.s32.totalorder %s27, 0
      %p54 = por %p52, %p53
      %s55 = ssub.s32 %s21, %s28
      %p56 = scmp.eq.s32.totalorder %s55, 0
      %s58 = sadd.s32 %s57, 1
      %s59 = scalar_select %p56, %s57, %s58
      %p62 = pneg %p56
      %p63 = scmp.eq.s32.totalorder %s21, 1
      %p64 = por %p62, %p63
      %p65 = scmp.ne.s32.totalorder %s57, %s60
      %p66 = scmp.eq.s32.totalorder %s21, 0
      %p67 = por %p65, %p66
      %p68 = scmp.ne.s32.totalorder %s57, %s60
      %p69 = scmp.eq.s32.totalorder %s26, 1
      %p70 = por %p68, %p69
      %p71 = scmp.ne.s32.totalorder %s60, %s61
      %p72 = scmp.eq.s32.totalorder %s26, 0
      %p73 = por %p71, %p72
      %p74 = scmp.ne.s32.totalorder %s60, %s61
      %p75 = scmp.eq.s32.totalorder %s27, 1
      %p76 = por %p74, %p75
      %p78 = scmp.ne.s32.totalorder %s61, %s77
      %p79 = scmp.eq.s32.totalorder %s27, 0
      %p80 = por %p78, %p79
      %s82 = sadd.s32 %s81, 1
      %p85 = scmp.eq.s32.totalorder %s21, 1
      %p86 = scmp.ne.s32.totalorder %s81, %s83
      %p87 = scmp.eq.s32.totalorder %s21, 0
      %p88 = por %p86, %p87
      %p89 = scmp.ne.s32.totalorder %s81, %s83
      %p90 = scmp.eq.s32.totalorder %s26, 1
      %p91 = por %p89, %p90
      %p92 = scmp.ne.s32.totalorder %s83, %s84
      %p93 = scmp.eq.s32.totalorder %s26, 0
      %p94 = por %p92, %p93
      %p95 = scmp.ne.s32.totalorder %s83, %s84
      %p96 = scmp.eq.s32.totalorder %s27, 1
      %p97 = por %p95, %p96
      %p99 = scmp.ne.s32.totalorder %s84, %s98
      %p100 = scmp.eq.s32.totalorder %s27, 0
      %p101 = por %p99, %p100
      %s103 = sadd.s32 %s102, 1
      %p106 = scmp.eq.s32.totalorder %s21, 1
      %p107 = scmp.ne.s32.totalorder %s102, %s104
      %p108 = scmp.eq.s32.totalorder %s21, 0
      %p109 = por %p107, %p108
      %p110 = scmp.ne.s32.totalorder %s102, %s104
      %p111 = scmp.eq.s32.totalorder %s26, 1
      %p112 = por %p110, %p111
      %p113 = scmp.ne.s32.totalorder %s104, %s105
      %p114 = scmp.eq.s32.totalorder %s26, 0
      %p115 = por %p113, %p114
      %p116 = scmp.ne.s32.totalorder %s104, %s105
      %p117 = scmp.eq.s32.totalorder %s27, 1
      %p118 = por %p116, %p117
      %p120 = scmp.ne.s32.totalorder %s105, %s119
      %p121 = scmp.eq.s32.totalorder %s27, 0
      %p122 = por %p120, %p121
      %s124 = sadd.s32 %s123, 1
      %p127 = scmp.eq.s32.totalorder %s21, 1
      %p128 = scmp.ne.s32.totalorder %s123, %s125
      %p129 = scmp.eq.s32.totalorder %s21, 0
      %p130 = por %p128, %p129
      %p131 = scmp.ne.s32.totalorder %s123, %s125
      %p132 = scmp.eq.s32.totalorder %s26, 1
      %p133 = por %p131, %p132
      %p134 = scmp.ne.s32.totalorder %s125, %s126
      %p135 = scmp.eq.s32.totalorder %s26, 0
      %p136 = por %p134, %p135
      %p137 = scmp.ne.s32.totalorder %s125, %s126
      %p138 = scmp.eq.s32.totalorder %s27, 1
      %p139 = por %p137, %p138
      %p141 = scmp.ne.s32.totalorder %s126, %s140
      %p142 = scmp.eq.s32.totalorder %s27, 0
      %p143 = por %p141, %p142
      %s144 = ssub.s32 %s21, %s28
      %p145 = scmp.eq.s32.totalorder %s144, 0
      %s147 = sadd.s32 %s146, 1
      %s148 = scalar_select %p145, %s146, %s147
      %p151 = pneg %p145
      %p152 = scmp.eq.s32.totalorder %s21, 1
      %p153 = por %p151, %p152
      %p154 = scmp.ne.s32.totalorder %s146, %s149
      %p155 = scmp.eq.s32.totalorder %s21, 0
      %p156 = por %p154, %p155
      %p157 = scmp.ne.s32.totalorder %s146, %s149
      %p158 = scmp.eq.s32.totalorder %s26, 1
      %p159 = por %p157, %p158
      %p160 = scmp.ne.s32.totalorder %s149, %s150
      %p161 = scmp.eq.s32.totalorder %s26, 0
      %p162 = por %p160, %p161
      %p163 = scmp.ne.s32.totalorder %s149, %s150
      %p164 = scmp.eq.s32.totalorder %s27, 1
      %p165 = por %p163, %p164
      %p167 = scmp.ne.s32.totalorder %s150, %s166
      %p168 = scmp.eq.s32.totalorder %s27, 0
      %p169 = por %p167, %p168
      %p170 = scmp.le.s32.totalorder 1, %s21
      %p171 = scmp.lt.s32.totalorder %s21, 3
      %p172 = pnand %p170, %p171
      %p173 = pneg %p172
      // Predicated region
      $region9: #{tpu_custom_call.1} parent=5 // pred_check
        _
      $region10: #{tpu_custom_call.1} parent=5 // pred_check_branch
        %175 = sbr.rel (%p172) target = $region12
      $region11: #{tpu_custom_call.1} parent=5 // pred_region
        %s176 = ssub.s32 %s21, 1
        // Predicated region
        $region13: #{tpu_custom_call.1} parent=11 // pred_check
          %p177 = pneg %p94
        $region14: #{tpu_custom_call.1} parent=11 // pred_check_branch
          %179 = sbr.rel (%p177) target = $region16
        $region15: #{tpu_custom_call.1} parent=11 // pred_region
          %181 = vsyncadd [#allocation6], 0
          %s183 = sshll.u32 %s2, 4
          %s184 = int_to_ptr.hbm [resolvable:$true] %s183
          %s185 = sshll.u32 [#allocation7], 4
          %s186 = int_to_ptr.vmem [resolvable:$true] %s185
          %188 = dma.hbm_to_vmem [thread:$0]  %s184, 32, %s186, [#allocation6]
        $region16: #{tpu_custom_call.1} parent=11 // pred_fallthru
          _
        // Predicated region
        $region17: #{tpu_custom_call.1} parent=11 // pred_check
          %p189 = pneg %p115
        $region18: #{tpu_custom_call.1} parent=11 // pred_check_branch
          %191 = sbr.rel (%p189) target = $region20
        $region19: #{tpu_custom_call.1} parent=11 // pred_region
          _
        $region20: #{tpu_custom_call.1} parent=11 // pred_fallthru
          _
        // Predicated region
        $region21: #{tpu_custom_call.1} parent=11 // pred_check
          %p192 = pneg %p136
        $region22: #{tpu_custom_call.1} parent=11 // pred_check_branch
          %194 = sbr.rel (%p192) target = $region24
        $region23: #{tpu_custom_call.1} parent=11 // pred_region
          %196 = vsyncadd [#allocation9], 0
          %s197 = sshll.u32 %s4, 4
          %s198 = int_to_ptr.hbm [resolvable:$true] %s197
          %s199 = sshll.u32 [#allocation8], 4
          %s200 = int_to_ptr.vmem [resolvable:$true] %s199
          %205 = dma.hbm_to_vmem [thread:$0]  %s198, 2048, %s200, [#allocation9], 128, 128, 8
        $region24: #{tpu_custom_call.1} parent=11 // pred_fallthru
          _
      $region12: #{tpu_custom_call.1} parent=5 // pred_fallthru
        _
      %p206 = scmp.lt.s32.totalorder %s21, 2
      // Predicated region
      $region25: #{tpu_custom_call.1} parent=5 // pred_check
        %p207 = pneg %p206
      $region26: #{tpu_custom_call.1} parent=5 // pred_check_branch
        %209 = sbr.rel (%p207) target = $region28
      $region27: #{tpu_custom_call.1} parent=5 // pred_region
        // Predicated region
        $region29: #{tpu_custom_call.1} parent=27 // pred_check
          %p210 = pneg %p41
        $region30: #{tpu_custom_call.1} parent=27 // pred_check_branch
          %212 = sbr.rel (%p210) target = $region32
        $region31: #{tpu_custom_call.1} parent=27 // pred_region
          %s213 = sand.u32 %s31, 1
          %s214 = scalar_lea.sflag [#allocation3], %s213
          %s215 = sand.u32 %s31, 1
          %s216 = smul.addr %s215, 64
          %s217 = scalar_lea.vmem [#allocation2], %s216
          %s218 = smul.u32 8, %s21
          %220 = vsyncadd %s214, 0
          %s221 = smul.addr %s218, 2
          %s222 = smul.addr %s221, 8
          %s223 = scalar_lea.hbm %s0, %s222
          %s224 = sshll.u32 %s223, 4
          %s225 = int_to_ptr.hbm [resolvable:$true] %s224
          %s226 = sshll.u32 %s217, 4
          %s227 = int_to_ptr.vmem [resolvable:$true] %s226
          %232 = dma.hbm_to_vmem [thread:$0]  %s225, 1024, %s227, %s214, 256, 128, 8
        $region32: #{tpu_custom_call.1} parent=27 // pred_fallthru
          _
        // Predicated region
        $region33: #{tpu_custom_call.1} parent=27 // pred_check
          %p233 = pneg %p67
        $region34: #{tpu_custom_call.1} parent=27 // pred_check_branch
          %235 = sbr.rel (%p233) target = $region36
        $region35: #{tpu_custom_call.1} parent=27 // pred_region
          %s236 = sand.u32 %s21, 1
          %s237 = scalar_lea.sflag [#allocation6], %s236
          %s238 = sand.u32 %s57, 1
          %s239 = smul.addr %s238, 64
          %s240 = scalar_lea.vmem [#allocation5], %s239
          %s241 = smul.u32 8, %s21
          %243 = vsyncadd %s237, 0
          %s244 = smul.addr %s241, 2
          %s245 = sadd.s32 1, %s244
          %s246 = smul.addr %s245, 8
          %s247 = scalar_lea.hbm %s1, %s246
          %s248 = sshll.u32 %s247, 4
          %s249 = int_to_ptr.hbm [resolvable:$true] %s248
          %s250 = sshll.u32 %s240, 4
          %s251 = int_to_ptr.vmem [resolvable:$true] %s250
          %256 = dma.hbm_to_vmem [thread:$0]  %s249, 1024, %s251, %s237, 256, 128, 8
        $region36: #{tpu_custom_call.1} parent=27 // pred_fallthru
          _
      $region28: #{tpu_custom_call.1} parent=5 // pred_fallthru
        _
      %p257 = scmp.le.s32.totalorder 1, %s21
      %p258 = scmp.lt.s32.totalorder %s21, 3
      %p259 = pnand %p257, %p258
      %p260 = pneg %p259
      // Predicated region
      $region37: #{tpu_custom_call.1} parent=5 // pred_check
        _
      $region38: #{tpu_custom_call.1} parent=5 // pred_check_branch
        %262 = sbr.rel (%p259) target = $region40
      $region39: #{tpu_custom_call.1} parent=5 // pred_region
        %s263 = ssub.s32 %s21, 1
        %s264 = sand.u32 %s34, 1
        %s265 = scalar_lea.sflag [#allocation3], %s264
        %s266 = sand.u32 %s34, 1
        %s267 = smul.addr %s266, 64
        %s268 = scalar_lea.vmem [#allocation2], %s267
        // Predicated region
        $region41: #{tpu_custom_call.1} parent=39 // pred_check
          %p269 = pneg %p47
        $region42: #{tpu_custom_call.1} parent=39 // pred_check_branch
          %271 = sbr.rel (%p269) target = $region44
        $region43: #{tpu_custom_call.1} parent=39 // pred_region
          %273 = dma.done %s265, 1024
        $region44: #{tpu_custom_call.1} parent=39 // pred_fallthru
          _
        %s274 = sand.u32 %s26, 1
        %s275 = scalar_lea.sflag [#allocation6], %s274
        %s276 = sand.u32 %s60, 1
        %s277 = smul.addr %s276, 64
        %s278 = scalar_lea.vmem [#allocation5], %s277
        // Predicated region
        $region45: #{tpu_custom_call.1} parent=39 // pred_check
          %p279 = pneg %p73
        $region46: #{tpu_custom_call.1} parent=39 // pred_check_branch
          %281 = sbr.rel (%p279) target = $region48
        $region47: #{tpu_custom_call.1} parent=39 // pred_region
          %283 = dma.done %s275, 1024
        $region48: #{tpu_custom_call.1} parent=39 // pred_fallthru
          _
        // Predicated region
        $region49: #{tpu_custom_call.1} parent=39 // pred_check
          %p284 = pneg %p94
        $region50: #{tpu_custom_call.1} parent=39 // pred_check_branch
          %286 = sbr.rel (%p284) target = $region52
        $region51: #{tpu_custom_call.1} parent=39 // pred_region
          %288 = dma.done [#allocation6], 32
        $region52: #{tpu_custom_call.1} parent=39 // pred_fallthru
          _
        // Predicated region
        $region53: #{tpu_custom_call.1} parent=39 // pred_check
          %p289 = pneg %p136
        $region54: #{tpu_custom_call.1} parent=39 // pred_check_branch
          %291 = sbr.rel (%p289) target = $region56
        $region55: #{tpu_custom_call.1} parent=39 // pred_region
          %293 = dma.done [#allocation9], 2048
        $region56: #{tpu_custom_call.1} parent=39 // pred_fallthru
          _
        %s294 = sand.u32 %s34, 1
        %s295 = scalar_lea.sflag [#allocation3], %s294
        %s296 = sand.u32 %s34, 1
        %s297 = smul.addr %s296, 64
        %s298 = scalar_lea.vmem [#allocation2], %s297
        %p299 = pneg %p47
        %p300 = pneg %p44
        %s301 = sand.u32 %s26, 1
        %s302 = scalar_lea.sflag [#allocation6], %s301
        %s303 = sand.u32 %s60, 1
        %s304 = smul.addr %s303, 64
        %s305 = scalar_lea.vmem [#allocation5], %s304
        %p306 = pneg %p73
        %p307 = pneg %p70
        %p308 = pneg %p94
        %p309 = pneg %p91
        %p310 = pneg %p115
        %p311 = pneg %p112
        %p312 = pneg %p136
        %p313 = pneg %p133
        %p314 = pneg %p162
        %p315 = pneg %p159
        %s316 = sand.u32 %s149, 1
        %s317 = scalar_lea.sflag [#allocation4], %s316
        %s318 = sand.u32 %s149, 1
        %s319 = smul.addr %s318, 64
        %s320 = scalar_lea.vmem [#allocation10], %s319
        %s321 = smul.u32 8, %s26
        %s322 = smul.u32 8, %s26
        %s323 = smul.u32 8, %s26
        %v324 = vld [vmem:[%s268] sm:$0xff]
        %v325 = vld [vmem:[%s268 + $0x8] sm:$0xff]
        %v326 = vld [vmem:[%s268 + $0x10] sm:$0xff]
        %v327 = vld [vmem:[%s268 + $0x18] sm:$0xff]
        %v328 = vld [vmem:[%s268 + $0x20] sm:$0xff]
        %v329 = vld [vmem:[%s268 + $0x28] sm:$0xff]
        %v330 = vld [vmem:[%s268 + $0x30] sm:$0xff]
        %v331 = vld [vmem:[%s268 + $0x38] sm:$0xff]
        %v332 = vld [vmem:[%s278] sm:$0xff]
        %v333 = vld [vmem:[%s278 + $0x8] sm:$0xff]
        %v334 = vld [vmem:[%s278 + $0x10] sm:$0xff]
        %v335 = vld [vmem:[%s278 + $0x18] sm:$0xff]
        %v336 = vld [vmem:[%s278 + $0x20] sm:$0xff]
        %v337 = vld [vmem:[%s278 + $0x28] sm:$0xff]
        %v338 = vld [vmem:[%s278 + $0x30] sm:$0xff]
        %v339 = vld [vmem:[%s278 + $0x38] sm:$0xff]
        %vm340 = vcmask 523264
        %v341 = vsel %vm340, %v324, 0.0
        %342 = vadd.xlane.f32.xlu0 %v341
        %v343 = vpop.xlane.xlu0 %342
        %v344 = vsel %vm340, %v325, 0.0
        %345 = vadd.xlane.f32.xlu0 %v344
        %v346 = vpop.xlane.xlu0 %345
        %v347 = vsel %vm340, %v326, 0.0
        %348 = vadd.xlane.f32.xlu0 %v347
        %v349 = vpop.xlane.xlu0 %348
        %v350 = vsel %vm340, %v327, 0.0
        %351 = vadd.xlane.f32.xlu0 %v350
        %v352 = vpop.xlane.xlu0 %351
        %v353 = vsel %vm340, %v328, 0.0
        %354 = vadd.xlane.f32.xlu0 %v353
        %v355 = vpop.xlane.xlu0 %354
        %v356 = vsel %vm340, %v329, 0.0
        %357 = vadd.xlane.f32.xlu0 %v356
        %v358 = vpop.xlane.xlu0 %357
        %v359 = vsel %vm340, %v330, 0.0
        %360 = vadd.xlane.f32.xlu0 %v359
        %v361 = vpop.xlane.xlu0 %360
        %v362 = vsel %vm340, %v331, 0.0
        %363 = vadd.xlane.f32.xlu0 %v362
        %v364 = vpop.xlane.xlu0 %363
        %v365 = vsel %vm340, %v332, 0.0
        %366 = vadd.xlane.f32.xlu0 %v365
        %v367 = vpop.xlane.xlu0 %366
        %v368 = vsel %vm340, %v333, 0.0
        %369 = vadd.xlane.f32.xlu0 %v368
        %v370 = vpop.xlane.xlu0 %369
        %v371 = vsel %vm340, %v334, 0.0
        %372 = vadd.xlane.f32.xlu0 %v371
        %v373 = vpop.xlane.xlu0 %372
        %v374 = vsel %vm340, %v335, 0.0
        %375 = vadd.xlane.f32.xlu0 %v374
        %v376 = vpop.xlane.xlu0 %375
        %v377 = vsel %vm340, %v336, 0.0
        %378 = vadd.xlane.f32.xlu0 %v377
        %v379 = vpop.xlane.xlu0 %378
        %v380 = vsel %vm340, %v337, 0.0
        %381 = vadd.xlane.f32.xlu0 %v380
        %v382 = vpop.xlane.xlu0 %381
        %v383 = vsel %vm340, %v338, 0.0
        %384 = vadd.xlane.f32.xlu0 %v383
        %v385 = vpop.xlane.xlu0 %384
        %v386 = vsel %vm340, %v339, 0.0
        %387 = vadd.xlane.f32.xlu0 %v386
        %v388 = vpop.xlane.xlu0 %387
        %v389 = vadd.f32 %v343, %v367
        %v390 = vadd.f32 %v346, %v370
        %v391 = vadd.f32 %v349, %v373
        %v392 = vadd.f32 %v352, %v376
        %v393 = vadd.f32 %v355, %v379
        %v394 = vadd.f32 %v358, %v382
        %v395 = vadd.f32 %v361, %v385
        %v396 = vadd.f32 %v364, %v388
        %v397 = vrcp.pop 128.0
        %v398 = vmul.f32 128.0, %v397
        %v399 = vsub.f32 1.0, %v398
        %v400 = vmul.f32 %v397, %v399
        %v401 = vadd.f32 %v397, %v400
        %vm402 = vweird.f32 %v397
        %v403 = vsel %vm402, %v397, %v401
        %v404 = vmul.f32 %v389, %v403
        %v405 = vmul.f32 %v390, %v403
        %v406 = vmul.f32 %v391, %v403
        %v407 = vmul.f32 %v392, %v403
        %v408 = vmul.f32 %v393, %v403
        %v409 = vmul.f32 %v394, %v403
        %v410 = vmul.f32 %v395, %v403
        %v411 = vmul.f32 %v396, %v403
        %v412 = vsub.f32 %v324, %v404
        %v413 = vsub.f32 %v325, %v405
        %v414 = vsub.f32 %v326, %v406
        %v415 = vsub.f32 %v327, %v407
        %v416 = vsub.f32 %v328, %v408
        %v417 = vsub.f32 %v329, %v409
        %v418 = vsub.f32 %v330, %v410
        %v419 = vsub.f32 %v331, %v411
        %v420 = vsub.f32 %v332, %v404
        %v421 = vsub.f32 %v333, %v405
        %v422 = vsub.f32 %v334, %v406
        %v423 = vsub.f32 %v335, %v407
        %v424 = vsub.f32 %v336, %v408
        %v425 = vsub.f32 %v337, %v409
        %v426 = vsub.f32 %v338, %v410
        %v427 = vsub.f32 %v339, %v411
        %v428 = vmul.f32 %v412, %v412
        %v429 = vmul.f32 %v413, %v413
        %v430 = vmul.f32 %v414, %v414
        %v431 = vmul.f32 %v415, %v415
        %v432 = vmul.f32 %v416, %v416
        %v433 = vmul.f32 %v417, %v417
        %v434 = vmul.f32 %v418, %v418
        %v435 = vmul.f32 %v419, %v419
        %v436 = vsel %vm340, %v428, 0.0
        %437 = vadd.xlane.f32.xlu0 %v436
        %v438 = vpop.xlane.xlu0 %437
        %v439 = vsel %vm340, %v429, 0.0
        %440 = vadd.xlane.f32.xlu0 %v439
        %v441 = vpop.xlane.xlu0 %440
        %v442 = vsel %vm340, %v430, 0.0
        %443 = vadd.xlane.f32.xlu0 %v442
        %v444 = vpop.xlane.xlu0 %443
        %v445 = vsel %vm340, %v431, 0.0
        %446 = vadd.xlane.f32.xlu0 %v445
        %v447 = vpop.xlane.xlu0 %446
        %v448 = vsel %vm340, %v432, 0.0
        %449 = vadd.xlane.f32.xlu0 %v448
        %v450 = vpop.xlane.xlu0 %449
        %v451 = vsel %vm340, %v433, 0.0
        %452 = vadd.xlane.f32.xlu0 %v451
        %v453 = vpop.xlane.xlu0 %452
        %v454 = vsel %vm340, %v434, 0.0
        %455 = vadd.xlane.f32.xlu0 %v454
        %v456 = vpop.xlane.xlu0 %455
        %v457 = vsel %vm340, %v435, 0.0
        %458 = vadd.xlane.f32.xlu0 %v457
        %v459 = vpop.xlane.xlu0 %458
        %v460 = vmul.f32 %v420, %v420
        %v461 = vmul.f32 %v421, %v421
        %v462 = vmul.f32 %v422, %v422
        %v463 = vmul.f32 %v423, %v423
        %v464 = vmul.f32 %v424, %v424
        %v465 = vmul.f32 %v425, %v425
        %v466 = vmul.f32 %v426, %v426
        %v467 = vmul.f32 %v427, %v427
        %v468 = vsel %vm340, %v460, 0.0
        %469 = vadd.xlane.f32.xlu0 %v468
        %v470 = vpop.xlane.xlu0 %469
        %v471 = vsel %vm340, %v461, 0.0
        %472 = vadd.xlane.f32.xlu0 %v471
        %v473 = vpop.xlane.xlu0 %472
        %v474 = vsel %vm340, %v462, 0.0
        %475 = vadd.xlane.f32.xlu0 %v474
        %v476 = vpop.xlane.xlu0 %475
        %v477 = vsel %vm340, %v463, 0.0
        %478 = vadd.xlane.f32.xlu0 %v477
        %v479 = vpop.xlane.xlu0 %478
        %v480 = vsel %vm340, %v464, 0.0
        %481 = vadd.xlane.f32.xlu0 %v480
        %v482 = vpop.xlane.xlu0 %481
        %v483 = vsel %vm340, %v465, 0.0
        %484 = vadd.xlane.f32.xlu0 %v483
        %v485 = vpop.xlane.xlu0 %484
        %v486 = vsel %vm340, %v466, 0.0
        %487 = vadd.xlane.f32.xlu0 %v486
        %v488 = vpop.xlane.xlu0 %487
        %v489 = vsel %vm340, %v467, 0.0
        %490 = vadd.xlane.f32.xlu0 %v489
        %v491 = vpop.xlane.xlu0 %490
        %v492 = vadd.f32 %v438, %v470
        %v493 = vadd.f32 %v441, %v473
        %v494 = vadd.f32 %v444, %v476
        %v495 = vadd.f32 %v447, %v479
        %v496 = vadd.f32 %v450, %v482
        %v497 = vadd.f32 %v453, %v485
        %v498 = vadd.f32 %v456, %v488
        %v499 = vadd.f32 %v459, %v491
        %v500 = vmul.f32 %v492, %v403
        %v501 = vmul.f32 %v493, %v403
        %v502 = vmul.f32 %v494, %v403
        %v503 = vmul.f32 %v495, %v403
        %v504 = vmul.f32 %v496, %v403
        %v505 = vmul.f32 %v497, %v403
        %v506 = vmul.f32 %v498, %v403
        %v507 = vmul.f32 %v499, %v403
        %v508 = vadd.f32 %v500, 1e-05
        %v509 = vadd.f32 %v501, 1e-05
        %v510 = vadd.f32 %v502, 1e-05
        %v511 = vadd.f32 %v503, 1e-05
        %v512 = vadd.f32 %v504, 1e-05
        %v513 = vadd.f32 %v505, 1e-05
        %v514 = vadd.f32 %v506, 1e-05
        %v515 = vadd.f32 %v507, 1e-05
        %v516 = vrsqrt.pop %v508
        %v517 = vmul.f32 %v516, %v508
        %v518 = vmul.f32 %v517, %v516
        %v519 = vmul.f32 0.5, %v518
        %v520 = vsub.f32 1.5, %v519
        %v521 = vmul.f32 %v516, %v520
        %vm522 = vweird.f32 %v508
        %vm523 = vweird.f32 %v516
        %vm524 = vmor %vm522, %vm523
        %v525 = vsel %vm524, %v516, %v521
        %v526 = vrsqrt.pop %v509
        %v527 = vmul.f32 %v526, %v509
        %v528 = vmul.f32 %v527, %v526
        %v529 = vmul.f32 0.5, %v528
        %v530 = vsub.f32 1.5, %v529
        %v531 = vmul.f32 %v526, %v530
        %vm532 = vweird.f32 %v509
        %vm533 = vweird.f32 %v526
        %vm534 = vmor %vm532, %vm533
        %v535 = vsel %vm534, %v526, %v531
        %v536 = vrsqrt.pop %v510
        %v537 = vmul.f32 %v536, %v510
        %v538 = vmul.f32 %v537, %v536
        %v539 = vmul.f32 0.5, %v538
        %v540 = vsub.f32 1.5, %v539
        %v541 = vmul.f32 %v536, %v540
        %vm542 = vweird.f32 %v510
        %vm543 = vweird.f32 %v536
        %vm544 = vmor %vm542, %vm543
        %v545 = vsel %vm544, %v536, %v541
        %v546 = vrsqrt.pop %v511
        %v547 = vmul.f32 %v546, %v511
        %v548 = vmul.f32 %v547, %v546
        %v549 = vmul.f32 0.5, %v548
        %v550 = vsub.f32 1.5, %v549
        %v551 = vmul.f32 %v546, %v550
        %vm552 = vweird.f32 %v511
        %vm553 = vweird.f32 %v546
        %vm554 = vmor %vm552, %vm553
        %v555 = vsel %vm554, %v546, %v551
        %v556 = vrsqrt.pop %v512
        %v557 = vmul.f32 %v556, %v512
        %v558 = vmul.f32 %v557, %v556
        %v559 = vmul.f32 0.5, %v558
        %v560 = vsub.f32 1.5, %v559
        %v561 = vmul.f32 %v556, %v560
        %vm562 = vweird.f32 %v512
        %vm563 = vweird.f32 %v556
        %vm564 = vmor %vm562, %vm563
        %v565 = vsel %vm564, %v556, %v561
        %v566 = vrsqrt.pop %v513
        %v567 = vmul.f32 %v566, %v513
        %v568 = vmul.f32 %v567, %v566
        %v569 = vmul.f32 0.5, %v568
        %v570 = vsub.f32 1.5, %v569
        %v571 = vmul.f32 %v566, %v570
        %vm572 = vweird.f32 %v513
        %vm573 = vweird.f32 %v566
        %vm574 = vmor %vm572, %vm573
        %v575 = vsel %vm574, %v566, %v571
        %v576 = vrsqrt.pop %v514
        %v577 = vmul.f32 %v576, %v514
        %v578 = vmul.f32 %v577, %v576
        %v579 = vmul.f32 0.5, %v578
        %v580 = vsub.f32 1.5, %v579
        %v581 = vmul.f32 %v576, %v580
        %vm582 = vweird.f32 %v514
        %vm583 = vweird.f32 %v576
        %vm584 = vmor %vm582, %vm583
        %v585 = vsel %vm584, %v576, %v581
        %v586 = vrsqrt.pop %v515
        %v587 = vmul.f32 %v586, %v515
        %v588 = vmul.f32 %v587, %v586
        %v589 = vmul.f32 0.5, %v588
        %v590 = vsub.f32 1.5, %v589
        %v591 = vmul.f32 %v586, %v590
        %vm592 = vweird.f32 %v515
        %vm593 = vweird.f32 %v586
        %vm594 = vmor %vm592, %vm593
        %v595 = vsel %vm594, %v586, %v591
        %v596 = vmul.f32 %v412, %v525
        %v597 = vmul.f32 %v413, %v535
        %v598 = vmul.f32 %v414, %v545
        %v599 = vmul.f32 %v415, %v555
        %v600 = vmul.f32 %v416, %v565
        %v601 = vmul.f32 %v417, %v575
        %v602 = vmul.f32 %v418, %v585
        %v603 = vmul.f32 %v419, %v595
        %v604 = vld [vmem:[#allocation7] sm:$0x1]
        %v605 = vperm.slane %v604, 0
        %v606 = vmul.f32 %v596, %v605
        %v607 = vmul.f32 %v597, %v605
        %v608 = vmul.f32 %v598, %v605
        %v609 = vmul.f32 %v599, %v605
        %v610 = vmul.f32 %v600, %v605
        %v611 = vmul.f32 %v601, %v605
        %v612 = vmul.f32 %v602, %v605
        %v613 = vmul.f32 %v603, %v605
        %v614 = vld [vmem:[%s3] sm:$0x1]
        %v615 = vperm.slane %v614, 0
        %v616 = vadd.f32 %v606, %v615
        %v617 = vadd.f32 %v607, %v615
        %v618 = vadd.f32 %v608, %v615
        %v619 = vadd.f32 %v609, %v615
        %v620 = vadd.f32 %v610, %v615
        %v621 = vadd.f32 %v611, %v615
        %v622 = vadd.f32 %v612, %v615
        %v623 = vadd.f32 %v613, %v615
        %v624 = vmul.f32 %v420, %v525
        %v625 = vmul.f32 %v421, %v535
        %v626 = vmul.f32 %v422, %v545
        %v627 = vmul.f32 %v423, %v555
        %v628 = vmul.f32 %v424, %v565
        %v629 = vmul.f32 %v425, %v575
        %v630 = vmul.f32 %v426, %v585
        %v631 = vmul.f32 %v427, %v595
        %v632 = vld [vmem:[#allocation7 + $0x1] sm:$0x1]
        %v633 = vperm.slane %v632, 0
        %v634 = vmul.f32 %v624, %v633
        %v635 = vmul.f32 %v625, %v633
        %v636 = vmul.f32 %v626, %v633
        %v637 = vmul.f32 %v627, %v633
        %v638 = vmul.f32 %v628, %v633
        %v639 = vmul.f32 %v629, %v633
        %v640 = vmul.f32 %v630, %v633
        %v641 = vmul.f32 %v631, %v633
        %v642 = vld [vmem:[%s3 + $0x1] sm:$0x1]
        %v643 = vperm.slane %v642, 0
        %v644 = vadd.f32 %v634, %v643
        %v645 = vadd.f32 %v635, %v643
        %v646 = vadd.f32 %v636, %v643
        %v647 = vadd.f32 %v637, %v643
        %v648 = vadd.f32 %v638, %v643
        %v649 = vadd.f32 %v639, %v643
        %v650 = vadd.f32 %v640, %v643
        %v651 = vadd.f32 %v641, %v643
        %v652 = vld [vmem:[#allocation8] sm:$0xff]
        %v653 = vld [vmem:[#allocation8 + $0x8] sm:$0xff]
        %v654 = vld [vmem:[#allocation8 + $0x10] sm:$0xff]
        %v655 = vld [vmem:[#allocation8 + $0x18] sm:$0xff]
        %v656 = vld [vmem:[#allocation8 + $0x20] sm:$0xff]
        %v657 = vld [vmem:[#allocation8 + $0x28] sm:$0xff]
        %v658 = vld [vmem:[#allocation8 + $0x30] sm:$0xff]
        %v659 = vld [vmem:[#allocation8 + $0x38] sm:$0xff]
        %s660 = scalar_lea.vmem [#allocation8], 64
        %v661 = vld [vmem:[%s660] sm:$0xff]
        %v662 = vld [vmem:[%s660 + $0x8] sm:$0xff]
        %v663 = vld [vmem:[%s660 + $0x10] sm:$0xff]
        %v664 = vld [vmem:[%s660 + $0x18] sm:$0xff]
        %v665 = vld [vmem:[%s660 + $0x20] sm:$0xff]
        %v666 = vld [vmem:[%s660 + $0x28] sm:$0xff]
        %v667 = vld [vmem:[%s660 + $0x30] sm:$0xff]
        %v668 = vld [vmem:[%s660 + $0x38] sm:$0xff]
        %v670 = vsel %vm340, %v644, 0
        %v673 = vsel %vm340, %v645, 0
        %v676 = vsel %vm340, %v646, 0
        %v679 = vsel %vm340, %v647, 0
        %v682 = vsel %vm340, %v648, 0
        %v685 = vsel %vm340, %v649, 0
        %v688 = vsel %vm340, %v650, 0
        %v691 = vsel %vm340, %v651, 0
        %693 = vmatpush.msra.mxu0 0.0
        %694 = vmatpush.msra.mxu0 0.0
        %695 = vmatpush.msra.mxu0 0.0
        %696 = vmatpush.msra.mxu0 0.0
        %697 = vmatpush.msra.mxu0 0.0
        %698 = vmatpush.msra.mxu0 0.0
        %699 = vmatpush.msra.mxu0 0.0
        %700 = vmatpush.msra.mxu0 0.0
        %701 = vmatpush.msra.mxu0 %v668
        %702 = vmatpush.msra.mxu0 %v667
        %703 = vmatpush.msra.mxu0 %v666
        %704 = vmatpush.msra.mxu0 %v665
        %705 = vmatpush.msra.mxu0 %v664
        %706 = vmatpush.msra.mxu0 %v663
        %707 = vmatpush.msra.mxu0 %v662
        %708 = vmatpush.msra.mxu0 %v661
        %709 = vmatmul.f32.gmra.mxu0 %v670
        %v710 = vpop.f32.mrf.mxu0
        %v711 = vadd.f32 0.0, %v710
        %712 = vmatmul.f32.gmra.mxu0 %v673
        %v713 = vpop.f32.mrf.mxu0
        %v714 = vadd.f32 0.0, %v713
        %715 = vmatmul.f32.gmra.mxu0 %v676
        %v716 = vpop.f32.mrf.mxu0
        %v717 = vadd.f32 0.0, %v716
        %718 = vmatmul.f32.gmra.mxu0 %v679
        %v719 = vpop.f32.mrf.mxu0
        %v720 = vadd.f32 0.0, %v719
        %721 = vmatmul.f32.gmra.mxu0 %v682
        %v722 = vpop.f32.mrf.mxu0
        %v723 = vadd.f32 0.0, %v722
        %724 = vmatmul.f32.gmra.mxu0 %v685
        %v725 = vpop.f32.mrf.mxu0
        %v726 = vadd.f32 0.0, %v725
        %727 = vmatmul.f32.gmra.mxu0 %v688
        %v728 = vpop.f32.mrf.mxu0
        %v729 = vadd.f32 0.0, %v728
        %730 = vmatmul.f32.gmra.mxu0 %v691
        %v731 = vpop.f32.mrf.mxu0
        %v732 = vadd.f32 0.0, %v731
        %733 = vdwg.mxu0
        %v735 = vsel %vm340, %v616, 0
        %v738 = vsel %vm340, %v617, 0
        %v741 = vsel %vm340, %v618, 0
        %v744 = vsel %vm340, %v619, 0
        %v747 = vsel %vm340, %v620, 0
        %v750 = vsel %vm340, %v621, 0
        %v753 = vsel %vm340, %v622, 0
        %v756 = vsel %vm340, %v623, 0
        %758 = vmatpush.msra.mxu0 0.0
        %759 = vmatpush.msra.mxu0 0.0
        %760 = vmatpush.msra.mxu0 0.0
        %761 = vmatpush.msra.mxu0 0.0
        %762 = vmatpush.msra.mxu0 0.0
        %763 = vmatpush.msra.mxu0 0.0
        %764 = vmatpush.msra.mxu0 0.0
        %765 = vmatpush.msra.mxu0 0.0
        %766 = vmatpush.msra.mxu0 %v659
        %767 = vmatpush.msra.mxu0 %v658
        %768 = vmatpush.msra.mxu0 %v657
        %769 = vmatpush.msra.mxu0 %v656
        %770 = vmatpush.msra.mxu0 %v655
        %771 = vmatpush.msra.mxu0 %v654
        %772 = vmatpush.msra.mxu0 %v653
        %773 = vmatpush.msra.mxu0 %v652
        %774 = vmatmul.f32.gmra.mxu0 %v735
        %v775 = vpop.f32.mrf.mxu0
        %v776 = vadd.f32 %v711, %v775
        %777 = vmatmul.f32.gmra.mxu0 %v738
        %v778 = vpop.f32.mrf.mxu0
        %v779 = vadd.f32 %v714, %v778
        %780 = vmatmul.f32.gmra.mxu0 %v741
        %v781 = vpop.f32.mrf.mxu0
        %v782 = vadd.f32 %v717, %v781
        %783 = vmatmul.f32.gmra.mxu0 %v744
        %v784 = vpop.f32.mrf.mxu0
        %v785 = vadd.f32 %v720, %v784
        %786 = vmatmul.f32.gmra.mxu0 %v747
        %v787 = vpop.f32.mrf.mxu0
        %v788 = vadd.f32 %v723, %v787
        %789 = vmatmul.f32.gmra.mxu0 %v750
        %v790 = vpop.f32.mrf.mxu0
        %v791 = vadd.f32 %v726, %v790
        %792 = vmatmul.f32.gmra.mxu0 %v753
        %v793 = vpop.f32.mrf.mxu0
        %v794 = vadd.f32 %v729, %v793
        %795 = vmatmul.f32.gmra.mxu0 %v756
        %v796 = vpop.f32.mrf.mxu0
        %v797 = vadd.f32 %v732, %v796
        %798 = vdwg.mxu0
        %799 = vst.msk [vmem:[%s320] sm:$0xff] %vm340, %v776
        %800 = vst.msk [vmem:[%s320 + $0x8] sm:$0xff] %vm340, %v779
        %801 = vst.msk [vmem:[%s320 + $0x10] sm:$0xff] %vm340, %v782
        %802 = vst.msk [vmem:[%s320 + $0x18] sm:$0xff] %vm340, %v785
        %803 = vst.msk [vmem:[%s320 + $0x20] sm:$0xff] %vm340, %v788
        %804 = vst.msk [vmem:[%s320 + $0x28] sm:$0xff] %vm340, %v791
        %805 = vst.msk [vmem:[%s320 + $0x30] sm:$0xff] %vm340, %v794
        %806 = vst.msk [vmem:[%s320 + $0x38] sm:$0xff] %vm340, %v797
        %s807 = sand.u32 %s149, 1
        %s808 = scalar_lea.sflag [#allocation4], %s807
        %s809 = sand.u32 %s149, 1
        %s810 = smul.addr %s809, 64
        %s811 = scalar_lea.vmem [#allocation10], %s810
        // Predicated region
        $region57: #{tpu_custom_call.1} parent=39 // pred_check
          %p812 = pneg %p159
        $region58: #{tpu_custom_call.1} parent=39 // pred_check_branch
          %814 = sbr.rel (%p812) target = $region60
        $region59: #{tpu_custom_call.1} parent=39 // pred_region
          %s815 = smul.u32 8, %s26
          %817 = vsyncadd %s808, 0
          %s818 = smul.addr %s815, 8
          %s819 = scalar_lea.hbm %s5, %s818
          %s820 = sshll.u32 %s811, 4
          %s821 = int_to_ptr.vmem [resolvable:$true] %s820
          %s822 = sshll.u32 %s819, 4
          %s823 = int_to_ptr.hbm [resolvable:$true] %s822
          %828 = dma.vmem_to_hbm [thread:$0]  %s821, 1024, %s823, %s808, 128, 128, 8
        $region60: #{tpu_custom_call.1} parent=39 // pred_fallthru
          _
      $region40: #{tpu_custom_call.1} parent=5 // pred_fallthru
        _
      %p829 = scmp.le.s32.totalorder 2, %s21
      // Predicated region
      $region61: #{tpu_custom_call.1} parent=5 // pred_check
        %p830 = pneg %p829
      $region62: #{tpu_custom_call.1} parent=5 // pred_check_branch
        %832 = sbr.rel (%p830) target = $region64
      $region63: #{tpu_custom_call.1} parent=5 // pred_region
        %s833 = ssub.s32 %s21, 2
        // Predicated region
        $region65: #{tpu_custom_call.1} parent=63 // pred_check
          %p834 = pneg %p165
        $region66: #{tpu_custom_call.1} parent=63 // pred_check_branch
          %836 = sbr.rel (%p834) target = $region68
        $region67: #{tpu_custom_call.1} parent=63 // pred_region
          %s837 = sand.u32 %s150, 1
          %s838 = scalar_lea.sflag [#allocation4], %s837
          %s839 = sand.u32 %s150, 1
          %s840 = smul.addr %s839, 64
          %s841 = scalar_lea.vmem [#allocation10], %s840
          %843 = dma.done %s838, 1024
        $region68: #{tpu_custom_call.1} parent=63 // pred_fallthru
          _
      $region64: #{tpu_custom_call.1} parent=5 // pred_fallthru
        _
    $region6: #{tpu_custom_call.1} parent=1 // loop_footer
      %s25 = sadd.s32 1, %s21
    $region7: #{tpu_custom_call.1} parent=1 // loop_footer_branch
      %20 = sbr.rel target = $region3
    $region8: #{tpu_custom_call.1} parent=1 // loop_exit
      _
    %844 = vsyncpa [#allocation3], 1
    %s845 = scalar_lea.sflag [#allocation3], 1
    %846 = vsyncpa %s845, 1
    %847 = vsyncpa [#allocation6], 1
    %s848 = scalar_lea.sflag [#allocation6], 1
    %849 = vsyncpa %s848, 1
    %850 = vsyncpa [#allocation9], 1
    %851 = vsyncpa [#allocation4], 1
    %s852 = scalar_lea.sflag [#allocation4], 1
    %853 = vsyncpa %s852, 1

</llo_original>
